<compile_context>
chip_gen: v5e
topology: v5e:2x2
jax: 0.10.0
libtpu: 0.0.40
codegen_flags: <defaults>
</compile_context>

<pallas_src>
import jax
import jax.numpy as jnp
from jax.experimental import pallas as pl
from jax.experimental.pallas import tpu as pltpu


def _round_up(x, m):
    return ((x + m - 1) // m) * m


# ---------------------------------------------------------------------------
# Kernels: fused clamp + row gather from the VMEM-resident table of one level.
# ---------------------------------------------------------------------------

def _embed_kernel_take(level_ref, ids_ref, tbl_ref, o_ref):
    # level_ref: (1,) int32 scalar-prefetch (consumed by the table index_map only)
    # ids_ref:   (TT, 1) int32 token ids for this tile
    # tbl_ref:   (V, D)  embedding table of the selected level (VMEM resident)
    # o_ref:     (TT, D) gathered embeddings for this tile
    del level_ref
    tbl = tbl_ref[...]                                       # (V, D)
    vocab, d = tbl.shape
    ids = jnp.clip(ids_ref[...], 0, vocab - 1)               # (TT, 1)  == torch .clamp
    idx = jnp.broadcast_to(ids, (ids.shape[0], d))           # (TT, D) row index per elem
    o_ref[...] = jnp.take_along_axis(tbl, idx, axis=0).astype(o_ref.dtype)


def _embed_kernel_onehot(level_ref, ids_ref, tbl_ref, o_ref):
    # Fallback path: exact one-hot (TT,V) @ (V,D) MXU gather.  The (1,V) iota is
    # broadcast against the (TT,1) ids so no (TT,V) int32 iota is materialized.
    del level_ref
    tbl = tbl_ref[...]                                       # (V, D)
    vocab = tbl.shape[0]
    ids = jnp.clip(ids_ref[...], 0, vocab - 1)               # (TT, 1)
    lane_iota = jax.lax.broadcasted_iota(jnp.int32, (1, vocab), 1)   # (1, V)
    onehot = (ids == lane_iota).astype(tbl.dtype)            # (TT, V) exact 0/1 weights
    o_ref[...] = jnp.dot(
        onehot, tbl, preferred_element_type=jnp.float32
    ).astype(o_ref.dtype)


# ---------------------------------------------------------------------------
# pallas_call builder, kernel selection (probe once, cache) and wrapper.
# ---------------------------------------------------------------------------

def _build_pallas_call(kernel_fn, *, n_pad, tt, vocab, emb_dim, tbl_dtype,
                       single_buffer_table):
    num_blocks = n_pad // tt
    tbl_spec_kwargs = {}
    if single_buffer_table:
        # Constant block index -> the table is fetched once; single-buffering halves
        # its VMEM residency (matters most on v7x's 64 MiB VMEM at larger vocab/D).
        tbl_spec_kwargs = dict(pipeline_mode=pl.Buffered(1))
    grid_spec = pltpu.PrefetchScalarGridSpec(
        num_scalar_prefetch=1,
        grid=(num_blocks,),
        in_specs=[
            # token ids: one (TT, 1) tile per grid step
            pl.BlockSpec((tt, 1), lambda i, lvl: (i, 0)),
            # full table of the prefetched level; constant block index -> resident
            pl.BlockSpec((None, vocab, emb_dim), lambda i, lvl: (lvl[0], 0, 0),
                         **tbl_spec_kwargs),
        ],
        out_specs=pl.BlockSpec((tt, emb_dim), lambda i, lvl: (i, 0)),
    )
    return pl.pallas_call(
        kernel_fn,
        out_shape=jax.ShapeDtypeStruct((n_pad, emb_dim), tbl_dtype),
        grid_spec=grid_spec,
        compiler_params=pltpu.CompilerParams(
            # independent token tiles -> megacore-shardable (2 TCs on v7x)
            dimension_semantics=("parallel",),
            # explicit, generation-safe scoped-VMEM limit (<= v7x's 64 MiB physical)
            vmem_limit_bytes=32 * 1024 * 1024,
        ),
    )


_ATTEMPTS = (
    (_embed_kernel_take, True),     # real gather, single-buffered table  (preferred)
    (_embed_kernel_take, False),
    (_embed_kernel_onehot, True),   # one-hot MXU fallback
    (_embed_kernel_onehot, False),
)
_KERNEL_CACHE = {}


def _run_pallas(level_arr, ids_col, tables, *, n_pad, tt):
    max_levels, vocab, emb_dim = tables.shape
    key = (n_pad, tt, vocab, emb_dim, str(tables.dtype))
    if key in _KERNEL_CACHE:
        return _KERNEL_CACHE[key](level_arr, ids_col, tables)

    # First call for this configuration: probe the preferred lowering, validate it
    # numerically once (cheap), and cache the working pallas_call.
    ref = jnp.take(jnp.take(tables, level_arr[0], axis=0),
                   jnp.clip(ids_col[:, 0], 0, vocab - 1), axis=0)
    last_err = None
    for kernel_fn, single_buffer in _ATTEMPTS:
        try:
            call = _build_pallas_call(
                kernel_fn, n_pad=n_pad, tt=tt, vocab=vocab, emb_dim=emb_dim,
                tbl_dtype=tables.dtype, single_buffer_table=single_buffer)
            out = jax.block_until_ready(call(level_arr, ids_col, tables))
        except Exception as e:       # lowering not supported on this toolchain/config
            last_err = e
            continue
        if bool(jnp.allclose(out, ref, atol=1e-6, rtol=1e-6)):
            _KERNEL_CACHE[key] = call
            return out
        last_err = AssertionError(
            f"{kernel_fn.__name__} lowered but produced incorrect results")
    raise last_err


def _choose_token_tile(n_tokens, vocab, itemsize):
    """Large tiles amortize per-grid-step overhead; capped so the one-hot fallback's
    (TT, vocab) intermediate stays <= ~8 MiB (safe on v7x's 64 MiB VMEM)."""
    onehot_budget = 8 * 1024 * 1024
    cap = max(8, (onehot_budget // max(vocab * max(int(itemsize), 4), 1)) // 8 * 8)
    tt_max = min(8192, cap)
    if n_tokens <= tt_max:
        if n_tokens >= 2048:
            # >= 2 parallel blocks so v7x's second TensorCore is not idle.
            return min(tt_max, _round_up((n_tokens + 1) // 2, 8))
        return _round_up(max(n_tokens, 1), 8)
    return tt_max


def hierarchical_embedding(token_ids, embedding_tables, level, *,
                           token_tile=None, min_pallas_tokens=1024):
    """token_ids: int array (any shape); embedding_tables: (max_levels, vocab, D)."""
    max_levels, vocab, emb_dim = embedding_tables.shape

    # `level` handling: static levels keep the module's ValueError; traced levels
    # (under jit) are clamped into range instead of raising.
    try:
        lvl_int = int(level)
    except Exception:
        lvl_int = None
    if lvl_int is not None:
        if lvl_int >= max_levels:
            raise ValueError(f"Level {lvl_int} exceeds max_levels {max_levels}")
        level_idx = lvl_int % max_levels if lvl_int < 0 else lvl_int
    else:
        level_idx = jnp.clip(jnp.asarray(level, jnp.int32), 0, max_levels - 1)

    assert vocab <= 2048, "VMEM-resident table path assumes a small vocabulary"

    n_tokens = int(token_ids.size)
    # Tiny inputs: the kernel is pure fixed overhead -> use XLA's native gather.
    if n_tokens == 0 or n_tokens < min_pallas_tokens:
        tbl = jnp.take(embedding_tables, jnp.asarray(level_idx, jnp.int32), axis=0)
        ids = jnp.clip(jnp.asarray(token_ids, jnp.int32), 0, vocab - 1)
        return jnp.take(tbl, ids, axis=0)

    itemsize = jnp.dtype(embedding_tables.dtype).itemsize
    if token_tile is None:
        tt = _choose_token_tile(n_tokens, vocab, itemsize)
    else:
        tt = max(8, _round_up(int(token_tile), 8))
    n_pad = _round_up(n_tokens, tt)

    ids_flat = jnp.asarray(token_ids, jnp.int32).reshape(-1)
    if n_pad != n_tokens:
        ids_flat = jnp.pad(ids_flat, (0, n_pad - n_tokens))   # pad rows are discarded
    ids_col = ids_flat.reshape(n_pad, 1)
    level_arr = jnp.asarray(level_idx, jnp.int32).reshape(1)

    out_pad = _run_pallas(level_arr, ids_col, embedding_tables, n_pad=n_pad, tt=tt)
    return out_pad[:n_tokens].reshape(*token_ids.shape, emb_dim)


def reference(token_ids, embedding_tables, level):
    vocab = embedding_tables.shape[1]
    ids = jnp.clip(token_ids, 0, vocab - 1)
    return jnp.take(embedding_tables[level], ids, axis=0)


if __name__ == "__main__":
    # Shapes consistent with the module: token_ids (batch, seq), embedding_dim=32.
    base_vocab_size = 64
    embedding_dim = 32
    max_levels = 3

    key = jax.random.PRNGKey(0)
    k_ids, k_emb, k_ids2 = jax.random.split(key, 3)
    embedding_tables = jax.random.normal(
        k_emb, (max_levels, base_vocab_size, embedding_dim), dtype=jnp.float32)

    # --- module-natural small shape (batch=2, seq=8), level=1 ---------------
    # Include out-of-range ids (negative and >= vocab) to exercise clamp semantics.
    B, S, level = 2, 8, 1
    token_ids = jax.random.randint(
        k_ids, (B, S), minval=-5, maxval=base_vocab_size + 10, dtype=jnp.int32)
    # Force the Pallas path even at this tiny size so the kernel itself is exercised.
    out_small = hierarchical_embedding(
        token_ids, embedding_tables, level, min_pallas_tokens=0)
    out_small = jax.block_until_ready(out_small)
    ref_small = reference(token_ids, embedding_tables, level)
    assert out_small.shape == (B, S, embedding_dim)
    assert jnp.allclose(out_small, ref_small, atol=1e-6, rtol=1e-6)

    # --- larger token count: multi-block "parallel" grid, default gating ----
    B2, S2, level2 = 4, 1024, 2
    token_ids2 = jax.random.randint(
        k_ids2, (B2, S2), minval=-5, maxval=base_vocab_size + 10, dtype=jnp.int32)
    out_big = hierarchical_embedding(token_ids2, embedding_tables, level2)
    out_big = jax.block_until_ready(out_big)
    ref_big = reference(token_ids2, embedding_tables, level2)
    assert out_big.shape == (B2, S2, embedding_dim)
    assert jnp.allclose(out_big, ref_big, atol=1e-6, rtol=1e-6)

    print("KERNEL_OK")
</pallas_src>

<mosaic_0001>
module attributes {stable_mosaic.version = 11 : i64} {
  func.func @_embed_kernel_take(%arg0: i32, %arg1: memref<1xi32, #tpu.memory_space<smem>>, %arg2: memref<16x1xi32, #tpu.memory_space<vmem>>, %arg3: memref<1x64x32xf32, #tpu.memory_space<vmem>>, %arg4: memref<16x32xf32, #tpu.memory_space<vmem>>) attributes {dimension_semantics = [#tpu.dimension_semantics<parallel>], iteration_bounds = array<i64: 1>, scalar_prefetch = 1 : i64, scratch_operands = 0 : i64, tpu.core_type = #tpu.core_type<tc>, window_params = [{transform_indices = @transform_0, window_bounds = array<i64: 16, 1>}, {pipeline_mode = #tpu.pipeline_mode<synchronous>, transform_indices = @transform_1, window_bounds = array<i64: 1, 64, 32>}, {transform_indices = @transform_2, window_bounds = array<i64: 16, 32>}]} {
    %c0 = arith.constant 0 : index
    %c0_0 = arith.constant 0 : index
    %c0_1 = arith.constant 0 : index
    %0 = vector.load %arg3[%c0, %c0_0, %c0_1] : memref<1x64x32xf32, #tpu.memory_space<vmem>>, vector<1x64x32xf32>
    %1 = vector.shape_cast %0 : vector<1x64x32xf32> to vector<64x32xf32>
    %c0_2 = arith.constant 0 : index
    %c0_3 = arith.constant 0 : index
    %2 = vector.load %arg2[%c0_2, %c0_3] : memref<16x1xi32, #tpu.memory_space<vmem>>, vector<16x1xi32>
    %c0_i32 = arith.constant 0 : i32
    %c63_i32 = arith.constant 63 : i32
    %3 = vector.broadcast %c0_i32 : i32 to vector<16x1xi32>
    %4 = arith.maxsi %3, %2 : vector<16x1xi32>
    %5 = vector.broadcast %c63_i32 : i32 to vector<16x1xi32>
    %6 = arith.minsi %5, %4 : vector<16x1xi32>
    %7 = vector.shape_cast %6 : vector<16x1xi32> to vector<16x1xi32>
    %8 = vector.broadcast %7 : vector<16x1xi32> to vector<16x32xi32>
    %c0_i32_4 = arith.constant 0 : i32
    %9 = vector.broadcast %c0_i32_4 : i32 to vector<16x32xi32>
    %10 = arith.cmpi slt, %8, %9 : vector<16x32xi32>
    %c64_i32 = arith.constant 64 : i32
    %11 = vector.broadcast %c64_i32 : i32 to vector<16x32xi32>
    %12 = arith.addi %8, %11 : vector<16x32xi32>
    %13 = arith.select %10, %12, %8 : vector<16x32xi1>, vector<16x32xi32>
    %14 = vector.shape_cast %13 : vector<16x32xi32> to vector<16x32x1xi32>
    %15 = vector.shape_cast %14 : vector<16x32x1xi32> to vector<16x32xi32>
    %16 = tpu.dynamic_gather %1[%15] in [0] : vector<64x32xf32>, vector<16x32xi32> -> vector<16x32xf32>
    %c0_5 = arith.constant 0 : index
    %c0_6 = arith.constant 0 : index
    %17 = vector.load %arg4[%c0_5, %c0_6] : memref<16x32xf32, #tpu.memory_space<vmem>>, vector<16x32xf32>
    tpu.vector_store %arg4[%c0_5, %c0_6], %16 {strides = array<i32>} : memref<16x32xf32, #tpu.memory_space<vmem>>, vector<16x32xf32>,
    return
  }
  func.func @transform_0(%arg0: i32, %arg1: memref<1xi32, #tpu.memory_space<smem>>) -> (i32, i32) {
    %c0_i32 = arith.constant 0 : i32
    %c0_i32_0 = arith.constant 0 : i32
    return %arg0, %c0_i32 : i32, i32
  }
  func.func @transform_1(%arg0: i32, %arg1: memref<1xi32, #tpu.memory_space<smem>>) -> (i32, i32, i32) {
    %c0 = arith.constant 0 : index
    %0 = memref.load %arg1[%c0] : memref<1xi32, #tpu.memory_space<smem>>
    %c0_i32 = arith.constant 0 : i32
    %c0_i32_0 = arith.constant 0 : i32
    %c0_i32_1 = arith.constant 0 : i32
    return %0, %c0_i32, %c0_i32_0 : i32, i32, i32
  }
  func.func @transform_2(%arg0: i32, %arg1: memref<1xi32, #tpu.memory_space<smem>>) -> (i32, i32) {
    %c0_i32 = arith.constant 0 : i32
    %c0_i32_0 = arith.constant 0 : i32
    return %arg0, %c0_i32 : i32, i32
  }
}

module attributes {stable_mosaic.version = 11 : i64} {
  func.func @_embed_kernel_take(%arg0: i32, %arg1: memref<1xi32, #tpu.memory_space<smem>>, %arg2: memref<16x1xi32, #tpu.memory_space<vmem>>, %arg3: memref<1x64x32xf32, #tpu.memory_space<vmem>>, %arg4: memref<16x32xf32, #tpu.memory_space<vmem>>) attributes {dimension_semantics = [#tpu.dimension_semantics<parallel>], iteration_bounds = array<i64: 1>, scalar_prefetch = 1 : i64, scratch_operands = 0 : i64, tpu.core_type = #tpu.core_type<tc>, window_params = [{transform_indices = @transform_0, window_bounds = array<i64: 16, 1>}, {transform_indices = @transform_1, window_bounds = array<i64: 1, 64, 32>}, {transform_indices = @transform_2, window_bounds = array<i64: 16, 32>}]} {
    %c0 = arith.constant 0 : index
    %c0_0 = arith.constant 0 : index
    %c0_1 = arith.constant 0 : index
    %0 = vector.load %arg3[%c0, %c0_0, %c0_1] : memref<1x64x32xf32, #tpu.memory_space<vmem>>, vector<1x64x32xf32>
    %1 = vector.shape_cast %0 : vector<1x64x32xf32> to vector<64x32xf32>
    %c0_2 = arith.constant 0 : index
    %c0_3 = arith.constant 0 : index
    %2 = vector.load %arg2[%c0_2, %c0_3] : memref<16x1xi32, #tpu.memory_space<vmem>>, vector<16x1xi32>
    %c0_i32 = arith.constant 0 : i32
    %c63_i32 = arith.constant 63 : i32
    %3 = vector.broadcast %c0_i32 : i32 to vector<16x1xi32>
    %4 = arith.maxsi %3, %2 : vector<16x1xi32>
    %5 = vector.broadcast %c63_i32 : i32 to vector<16x1xi32>
    %6 = arith.minsi %5, %4 : vector<16x1xi32>
    %7 = vector.shape_cast %6 : vector<16x1xi32> to vector<16x1xi32>
    %8 = vector.broadcast %7 : vector<16x1xi32> to vector<16x32xi32>
    %c0_i32_4 = arith.constant 0 : i32
    %9 = vector.broadcast %c0_i32_4 : i32 to vector<16x32xi32>
    %10 = arith.cmpi slt, %8, %9 : vector<16x32xi32>
    %c64_i32 = arith.constant 64 : i32
    %11 = vector.broadcast %c64_i32 : i32 to vector<16x32xi32>
    %12 = arith.addi %8, %11 : vector<16x32xi32>
    %13 = arith.select %10, %12, %8 : vector<16x32xi1>, vector<16x32xi32>
    %14 = vector.shape_cast %13 : vector<16x32xi32> to vector<16x32x1xi32>
    %15 = vector.shape_cast %14 : vector<16x32x1xi32> to vector<16x32xi32>
    %16 = tpu.dynamic_gather %1[%15] in [0] : vector<64x32xf32>, vector<16x32xi32> -> vector<16x32xf32>
    %c0_5 = arith.constant 0 : index
    %c0_6 = arith.constant 0 : index
    %17 = vector.load %arg4[%c0_5, %c0_6] : memref<16x32xf32, #tpu.memory_space<vmem>>, vector<16x32xf32>
    tpu.vector_store %arg4[%c0_5, %c0_6], %16 {strides = array<i32>} : memref<16x32xf32, #tpu.memory_space<vmem>>, vector<16x32xf32>,
    return
  }
  func.func @transform_0(%arg0: i32, %arg1: memref<1xi32, #tpu.memory_space<smem>>) -> (i32, i32) {
    %c0_i32 = arith.constant 0 : i32
    %c0_i32_0 = arith.constant 0 : i32
    return %arg0, %c0_i32 : i32, i32
  }
  func.func @transform_1(%arg0: i32, %arg1: memref<1xi32, #tpu.memory_space<smem>>) -> (i32, i32, i32) {
    %c0 = arith.constant 0 : index
    %0 = memref.load %arg1[%c0] : memref<1xi32, #tpu.memory_space<smem>>
    %c0_i32 = arith.constant 0 : i32
    %c0_i32_0 = arith.constant 0 : i32
    %c0_i32_1 = arith.constant 0 : i32
    return %0, %c0_i32, %c0_i32_0 : i32, i32, i32
  }
  func.func @transform_2(%arg0: i32, %arg1: memref<1xi32, #tpu.memory_space<smem>>) -> (i32, i32) {
    %c0_i32 = arith.constant 0 : i32
    %c0_i32_0 = arith.constant 0 : i32
    return %arg0, %c0_i32 : i32, i32
  }
}

module attributes {stable_mosaic.version = 11 : i64} {
  func.func @_embed_kernel_onehot(%arg0: i32, %arg1: memref<1xi32, #tpu.memory_space<smem>>, %arg2: memref<16x1xi32, #tpu.memory_space<vmem>>, %arg3: memref<1x64x32xf32, #tpu.memory_space<vmem>>, %arg4: memref<16x32xf32, #tpu.memory_space<vmem>>) attributes {dimension_semantics = [#tpu.dimension_semantics<parallel>], iteration_bounds = array<i64: 1>, scalar_prefetch = 1 : i64, scratch_operands = 0 : i64, tpu.core_type = #tpu.core_type<tc>, window_params = [{transform_indices = @transform_0, window_bounds = array<i64: 16, 1>}, {pipeline_mode = #tpu.pipeline_mode<synchronous>, transform_indices = @transform_1, window_bounds = array<i64: 1, 64, 32>}, {transform_indices = @transform_2, window_bounds = array<i64: 16, 32>}]} {
    %c0 = arith.constant 0 : index
    %c0_0 = arith.constant 0 : index
    %c0_1 = arith.constant 0 : index
    %0 = vector.load %arg3[%c0, %c0_0, %c0_1] : memref<1x64x32xf32, #tpu.memory_space<vmem>>, vector<1x64x32xf32>
    %1 = vector.shape_cast %0 : vector<1x64x32xf32> to vector<64x32xf32>
    %c0_2 = arith.constant 0 : index
    %c0_3 = arith.constant 0 : index
    %2 = vector.load %arg2[%c0_2, %c0_3] : memref<16x1xi32, #tpu.memory_space<vmem>>, vector<16x1xi32>
    %c0_i32 = arith.constant 0 : i32
    %c63_i32 = arith.constant 63 : i32
    %3 = vector.broadcast %c0_i32 : i32 to vector<16x1xi32>
    %4 = arith.maxsi %3, %2 : vector<16x1xi32>
    %5 = vector.broadcast %c63_i32 : i32 to vector<16x1xi32>
    %6 = arith.minsi %5, %4 : vector<16x1xi32>
    %7 = tpu.iota {dimensions = array<i32: 1>} : vector<1x64xi32>
    %8 = vector.broadcast %6 : vector<16x1xi32> to vector<16x64xi32>
    %9 = vector.broadcast %7 : vector<1x64xi32> to vector<16x64xi32>
    %10 = arith.cmpi eq, %8, %9 : vector<16x64xi32>
    %11 = arith.extui %10 : vector<16x64xi1> to vector<16x64xi32>
    %12 = arith.sitofp %11 : vector<16x64xi32> to vector<16x64xf32>
    %cst = arith.constant dense<0.000000e+00> : vector<16x32xf32>
    %13 = tpu.matmul %12, %1, %cst {dimension_numbers = #tpu.dot_dimension_numbers<[1], [0], [0], [1], [0, 0, 1, 1], [], []>} : vector<16x64xf32>, vector<64x32xf32>, vector<16x32xf32> -> vector<16x32xf32>
    %c0_4 = arith.constant 0 : index
    %c0_5 = arith.constant 0 : index
    %14 = vector.load %arg4[%c0_4, %c0_5] : memref<16x32xf32, #tpu.memory_space<vmem>>, vector<16x32xf32>
    tpu.vector_store %arg4[%c0_4, %c0_5], %13 {strides = array<i32>} : memref<16x32xf32, #tpu.memory_space<vmem>>, vector<16x32xf32>,
    return
  }
  func.func @transform_0(%arg0: i32, %arg1: memref<1xi32, #tpu.memory_space<smem>>) -> (i32, i32) {
    %c0_i32 = arith.constant 0 : i32
    %c0_i32_0 = arith.constant 0 : i32
    return %arg0, %c0_i32 : i32, i32
  }
  func.func @transform_1(%arg0: i32, %arg1: memref<1xi32, #tpu.memory_space<smem>>) -> (i32, i32, i32) {
    %c0 = arith.constant 0 : index
    %0 = memref.load %arg1[%c0] : memref<1xi32, #tpu.memory_space<smem>>
    %c0_i32 = arith.constant 0 : i32
    %c0_i32_0 = arith.constant 0 : i32
    %c0_i32_1 = arith.constant 0 : i32
    return %0, %c0_i32, %c0_i32_0 : i32, i32, i32
  }
  func.func @transform_2(%arg0: i32, %arg1: memref<1xi32, #tpu.memory_space<smem>>) -> (i32, i32) {
    %c0_i32 = arith.constant 0 : i32
    %c0_i32_0 = arith.constant 0 : i32
    return %arg0, %c0_i32 : i32, i32
  }
}

module attributes {stable_mosaic.version = 11 : i64} {
  func.func @_embed_kernel_onehot(%arg0: i32, %arg1: memref<1xi32, #tpu.memory_space<smem>>, %arg2: memref<16x1xi32, #tpu.memory_space<vmem>>, %arg3: memref<1x64x32xf32, #tpu.memory_space<vmem>>, %arg4: memref<16x32xf32, #tpu.memory_space<vmem>>) attributes {dimension_semantics = [#tpu.dimension_semantics<parallel>], iteration_bounds = array<i64: 1>, scalar_prefetch = 1 : i64, scratch_operands = 0 : i64, tpu.core_type = #tpu.core_type<tc>, window_params = [{transform_indices = @transform_0, window_bounds = array<i64: 16, 1>}, {transform_indices = @transform_1, window_bounds = array<i64: 1, 64, 32>}, {transform_indices = @transform_2, window_bounds = array<i64: 16, 32>}]} {
    %c0 = arith.constant 0 : index
    %c0_0 = arith.constant 0 : index
    %c0_1 = arith.constant 0 : index
    %0 = vector.load %arg3[%c0, %c0_0, %c0_1] : memref<1x64x32xf32, #tpu.memory_space<vmem>>, vector<1x64x32xf32>
    %1 = vector.shape_cast %0 : vector<1x64x32xf32> to vector<64x32xf32>
    %c0_2 = arith.constant 0 : index
    %c0_3 = arith.constant 0 : index
    %2 = vector.load %arg2[%c0_2, %c0_3] : memref<16x1xi32, #tpu.memory_space<vmem>>, vector<16x1xi32>
    %c0_i32 = arith.constant 0 : i32
    %c63_i32 = arith.constant 63 : i32
    %3 = vector.broadcast %c0_i32 : i32 to vector<16x1xi32>
    %4 = arith.maxsi %3, %2 : vector<16x1xi32>
    %5 = vector.broadcast %c63_i32 : i32 to vector<16x1xi32>
    %6 = arith.minsi %5, %4 : vector<16x1xi32>
    %7 = tpu.iota {dimensions = array<i32: 1>} : vector<1x64xi32>
    %8 = vector.broadcast %6 : vector<16x1xi32> to vector<16x64xi32>
    %9 = vector.broadcast %7 : vector<1x64xi32> to vector<16x64xi32>
    %10 = arith.cmpi eq, %8, %9 : vector<16x64xi32>
    %11 = arith.extui %10 : vector<16x64xi1> to vector<16x64xi32>
    %12 = arith.sitofp %11 : vector<16x64xi32> to vector<16x64xf32>
    %cst = arith.constant dense<0.000000e+00> : vector<16x32xf32>
    %13 = tpu.matmul %12, %1, %cst {dimension_numbers = #tpu.dot_dimension_numbers<[1], [0], [0], [1], [0, 0, 1, 1], [], []>} : vector<16x64xf32>, vector<64x32xf32>, vector<16x32xf32> -> vector<16x32xf32>
    %c0_4 = arith.constant 0 : index
    %c0_5 = arith.constant 0 : index
    %14 = vector.load %arg4[%c0_4, %c0_5] : memref<16x32xf32, #tpu.memory_space<vmem>>, vector<16x32xf32>
    tpu.vector_store %arg4[%c0_4, %c0_5], %13 {strides = array<i32>} : memref<16x32xf32, #tpu.memory_space<vmem>>, vector<16x32xf32>,
    return
  }
  func.func @transform_0(%arg0: i32, %arg1: memref<1xi32, #tpu.memory_space<smem>>) -> (i32, i32) {
    %c0_i32 = arith.constant 0 : i32
    %c0_i32_0 = arith.constant 0 : i32
    return %arg0, %c0_i32 : i32, i32
  }
  func.func @transform_1(%arg0: i32, %arg1: memref<1xi32, #tpu.memory_space<smem>>) -> (i32, i32, i32) {
    %c0 = arith.constant 0 : index
    %0 = memref.load %arg1[%c0] : memref<1xi32, #tpu.memory_space<smem>>
    %c0_i32 = arith.constant 0 : i32
    %c0_i32_0 = arith.constant 0 : i32
    %c0_i32_1 = arith.constant 0 : i32
    return %0, %c0_i32, %c0_i32_0 : i32, i32, i32
  }
  func.func @transform_2(%arg0: i32, %arg1: memref<1xi32, #tpu.memory_space<smem>>) -> (i32, i32) {
    %c0_i32 = arith.constant 0 : i32
    %c0_i32_0 = arith.constant 0 : i32
    return %arg0, %c0_i32 : i32, i32
  }
}

</mosaic_0001>

<llo_original>
// kernel: tpu_custom_call.1
$region0: #{tpu_custom_call.1}
  #allocation0 [shape = 'u32[]', space=smem, size = 0x4, offset = 0x4, fixed_abs, tag = 'smem constant byte address 0x4 - core index']
  #allocation1 [shape = 'u32[72,128]{1,0:T(1,128)}', space=vmem, size = 0x9000, scoped, tag = 'internal scratch']
  #allocation2 [shape = 's32[1]{0}', space=sflag, size = 0x4, scoped, tag = 'scoped memory for tpu_custom_call.1']
  #allocation3 [shape = 's32[1]{0:T(128)S(6)}', space=smem, size = 0x200, scoped, tag = 'prefetched SMEM operand 0']
  %s0 = inlined_call_operand.<no memory space> [shape: s32[1], index: 0, kind: input, shape index: {}]
  %s1 = inlined_call_operand.vmem [shape: s32[16,1], index: 1, kind: input, shape index: {}]
  %s2 = inlined_call_operand.vmem [shape: f32[3,64,32], index: 2, kind: input, shape index: {}]
  %s3 = inlined_call_operand.hbm [shape: f32[16,32], index: 3, kind: output, shape index: {}]
  %s4 = sld [smem:[#allocation0]]
  $region18: #{tpu_custom_call.1} parent=0
    _
  %s6 = ssub.s32 1, %s4
  %s7 = scalar_select 0, %s6, %s4
  %8 = sst [smem:[#allocation3]] %s0
  $region1: #{tpu_custom_call.1} parent=0
    #allocation4 [shape = 'u8[8192]{0}', space=vmem, size = 0x2000, scoped, tag = 'output window, operand 0, single buffered']
    #allocation5 [shape = 's32[1]{0}', space=sflag, size = 0x4, scoped, tag = 'scoped memory for tpu_custom_call.1']
    %9 = vsyncpa [#allocation5], 0
    // Predicated region
    $region2: #{tpu_custom_call.1} parent=1 // pred_check
      _
    $region3: #{tpu_custom_call.1} parent=1 // pred_check_branch
      %11 = sbr.rel (0) target = $region5
    $region4: #{tpu_custom_call.1} parent=1 // pred_region
      _
    $region5: #{tpu_custom_call.1} parent=1 // pred_fallthru
      _
    // Predicated region
    $region6: #{tpu_custom_call.1} parent=1 // pred_check
      _
    $region7: #{tpu_custom_call.1} parent=1 // pred_check_branch
      %13 = sbr.rel (0) target = $region9
    $region8: #{tpu_custom_call.1} parent=1 // pred_region
      %s14 = sld [smem:[#allocation3]]
      %p15 = scmp.lt.s32.totalorder %s14, 2
      %s16 = scalar_select %p15, %s14, 2
      %s17 = smul.addr %s16, 8
      %s18 = smul.addr %s17, 8
      %s19 = scalar_lea.vmem %s2, %s18
      %s20 = sld [smem:[#allocation3]]
    $region9: #{tpu_custom_call.1} parent=1 // pred_fallthru
      _
    %s21 = sld [smem:[#allocation3]]
    %p22 = scmp.lt.s32.totalorder %s21, 2
    %s23 = scalar_select %p22, %s21, 2
    %s24 = smul.addr %s23, 8
    %s25 = smul.addr %s24, 8
    %s26 = scalar_lea.vmem %s2, %s25
    %s27 = sld [smem:[#allocation3]]
    %p28 = scmp.lt.s32.totalorder %s27, 2
    %s29 = scalar_select %p28, %s27, 2
    %s30 = smul.addr %s29, 8
    %s31 = smul.addr %s30, 8
    %s32 = scalar_lea.vmem %s2, %s31
    %s33 = sld [smem:[#allocation3]]
    %v34 = vld [vmem:[%s32] sm:$0xff]
    %v35 = vld [vmem:[%s32 + $0x8] sm:$0xff]
    %v36 = vld [vmem:[%s32 + $0x10] sm:$0xff]
    %v37 = vld [vmem:[%s32 + $0x18] sm:$0xff]
    %v38 = vld [vmem:[%s32 + $0x20] sm:$0xff]
    %v39 = vld [vmem:[%s32 + $0x28] sm:$0xff]
    %v40 = vld [vmem:[%s32 + $0x30] sm:$0xff]
    %v41 = vld [vmem:[%s32 + $0x38] sm:$0xff]
    %v42 = vld [vmem:[%s1] sm:$0xff]
    %v43 = vld [vmem:[%s1 + $0x8] sm:$0xff]
    %vm44 = vcmp.gt.s32.totalorder %v42, 0
    %v45 = vsel %vm44, %v42, 0
    %vm46 = vcmp.gt.s32.totalorder %v43, 0
    %v47 = vsel %vm46, %v43, 0
    %vm48 = vcmp.lt.s32.totalorder %v45, 63
    %v49 = vsel %vm48, %v45, 63
    %vm50 = vcmp.lt.s32.totalorder %v47, 63
    %v51 = vsel %vm50, %v47, 63
    %v52 = vlaneseq
    %v53 = vand.u32 %v52, 127
    %54 = vset.pattern.permute.xlu0 0
    %55 = vperm.xlu0 %54, %v49
    %v56 = vpop.permute.xlu0 %55
    %57 = vset.pattern.permute.xlu0 0
    %58 = vperm.xlu0 %57, %v51
    %v59 = vpop.permute.xlu0 %58
    %vm60 = vcmp.eq.s32.totalorder %v56, %v53
    %vm61 = vcmp.eq.s32.totalorder %v59, %v53
    %v62 = vsel %vm60, 1, 0
    %v63 = vsel %vm61, 1, 0
    %v64 = vcvt.s32.f32 %v62
    %v65 = vcvt.s32.f32 %v63
    %vm66 = vcmask 523264
    %v68 = vsel %vm66, %v64, 0
    %v71 = vsel %vm66, %v65, 0
    %73 = vmatpush.msra.mxu0 0.0
    %74 = vmatpush.msra.mxu0 0.0
    %75 = vmatpush.msra.mxu0 0.0
    %76 = vmatpush.msra.mxu0 0.0
    %77 = vmatpush.msra.mxu0 0.0
    %78 = vmatpush.msra.mxu0 0.0
    %79 = vmatpush.msra.mxu0 0.0
    %80 = vmatpush.msra.mxu0 0.0
    %81 = vmatpush.msra.mxu0 %v41
    %82 = vmatpush.msra.mxu0 %v40
    %83 = vmatpush.msra.mxu0 %v39
    %84 = vmatpush.msra.mxu0 %v38
    %85 = vmatpush.msra.mxu0 %v37
    %86 = vmatpush.msra.mxu0 %v36
    %87 = vmatpush.msra.mxu0 %v35
    %88 = vmatpush.msra.mxu0 %v34
    %89 = vmatmul.f32.gmra.mxu0 %v68
    %v90 = vpop.f32.mrf.mxu0
    %v91 = vadd.f32 0.0, %v90
    %92 = vmatmul.f32.gmra.mxu0 %v71
    %v93 = vpop.f32.mrf.mxu0
    %v94 = vadd.f32 0.0, %v93
    %95 = vdwg.mxu0
    %vm96 = vcmask 261120
    %97 = vst.msk [vmem:[#allocation4] sm:$0xff] %vm96, %v91
    %98 = vst.msk [vmem:[#allocation4 + $0x8] sm:$0xff] %vm96, %v94
    // Predicated region
    $region10: #{tpu_custom_call.1} parent=1 // pred_check
      _
    $region11: #{tpu_custom_call.1} parent=1 // pred_check_branch
      %100 = sbr.rel (0) target = $region13
    $region12: #{tpu_custom_call.1} parent=1 // pred_region
      %102 = vsyncadd [#allocation5], 0
      %s103 = sshll.u32 [#allocation4], 4
      %s104 = int_to_ptr.vmem [resolvable:$true] %s103
      %s105 = sshll.u32 %s3, 4
      %s106 = int_to_ptr.hbm [resolvable:$true] %s105
      %111 = dma.vmem_to_hbm [thread:$0]  %s104, 256, %s106, [#allocation5], 128, 128, 8
    $region13: #{tpu_custom_call.1} parent=1 // pred_fallthru
      _
    // Predicated region
    $region14: #{tpu_custom_call.1} parent=1 // pred_check
      _
    $region15: #{tpu_custom_call.1} parent=1 // pred_check_branch
      %113 = sbr.rel (0) target = $region17
    $region16: #{tpu_custom_call.1} parent=1 // pred_region
      %115 = dma.done [#allocation5], 256
    $region17: #{tpu_custom_call.1} parent=1 // pred_fallthru
      _
    %116 = vsyncpa [#allocation5], 1

// kernel: tpu_custom_call.1
$region0: #{tpu_custom_call.1}
  #allocation0 [shape = 'u32[]', space=smem, size = 0x4, offset = 0x4, fixed_abs, tag = 'smem constant byte address 0x4 - core index']
  #allocation1 [shape = 'u32[72,128]{1,0:T(1,128)}', space=vmem, size = 0x9000, scoped, tag = 'internal scratch']
  #allocation2 [shape = 's32[1]{0}', space=sflag, size = 0x4, scoped, tag = 'scoped memory for tpu_custom_call.1']
  #allocation3 [shape = 's32[1]{0:T(128)S(6)}', space=smem, size = 0x200, scoped, tag = 'prefetched SMEM operand 0']
  %s0 = inlined_call_operand.<no memory space> [shape: s32[1], index: 0, kind: input, shape index: {}]
  %s1 = inlined_call_operand.vmem [shape: s32[16,1], index: 1, kind: input, shape index: {}]
  %s2 = inlined_call_operand.vmem [shape: f32[3,64,32], index: 2, kind: input, shape index: {}]
  %s3 = inlined_call_operand.hbm [shape: f32[16,32], index: 3, kind: output, shape index: {}]
  %s4 = sld [smem:[#allocation0]]
  $region18: #{tpu_custom_call.1} parent=0
    _
  %s6 = ssub.s32 1, %s4
  %s7 = scalar_select 0, %s6, %s4
  %8 = sst [smem:[#allocation3]] %s0
  $region1: #{tpu_custom_call.1} parent=0
    #allocation4 [shape = 'u8[8192]{0}', space=vmem, size = 0x2000, scoped, tag = 'output window, operand 0, single buffered']
    #allocation5 [shape = 's32[1]{0}', space=sflag, size = 0x4, scoped, tag = 'scoped memory for tpu_custom_call.1']
    %9 = vsyncpa [#allocation5], 0
    // Predicated region
    $region2: #{tpu_custom_call.1} parent=1 // pred_check
      _
    $region3: #{tpu_custom_call.1} parent=1 // pred_check_branch
      %11 = sbr.rel (0) target = $region5
    $region4: #{tpu_custom_call.1} parent=1 // pred_region
      _
    $region5: #{tpu_custom_call.1} parent=1 // pred_fallthru
      _
    // Predicated region
    $region6: #{tpu_custom_call.1} parent=1 // pred_check
      _
    $region7: #{tpu_custom_call.1} parent=1 // pred_check_branch
      %13 = sbr.rel (0) target = $region9
    $region8: #{tpu_custom_call.1} parent=1 // pred_region
      %s14 = sld [smem:[#allocation3]]
      %p15 = scmp.lt.s32.totalorder %s14, 2
      %s16 = scalar_select %p15, %s14, 2
      %s17 = smul.addr %s16, 8
      %s18 = smul.addr %s17, 8
      %s19 = scalar_lea.vmem %s2, %s18
      %s20 = sld [smem:[#allocation3]]
    $region9: #{tpu_custom_call.1} parent=1 // pred_fallthru
      _
    %s21 = sld [smem:[#allocation3]]
    %p22 = scmp.lt.s32.totalorder %s21, 2
    %s23 = scalar_select %p22, %s21, 2
    %s24 = smul.addr %s23, 8
    %s25 = smul.addr %s24, 8
    %s26 = scalar_lea.vmem %s2, %s25
    %s27 = sld [smem:[#allocation3]]
    %p28 = scmp.lt.s32.totalorder %s27, 2
    %s29 = scalar_select %p28, %s27, 2
    %s30 = smul.addr %s29, 8
    %s31 = smul.addr %s30, 8
    %s32 = scalar_lea.vmem %s2, %s31
    %s33 = sld [smem:[#allocation3]]
    %v34 = vld [vmem:[%s32] sm:$0xff]
    %v35 = vld [vmem:[%s32 + $0x8] sm:$0xff]
    %v36 = vld [vmem:[%s32 + $0x10] sm:$0xff]
    %v37 = vld [vmem:[%s32 + $0x18] sm:$0xff]
    %v38 = vld [vmem:[%s32 + $0x20] sm:$0xff]
    %v39 = vld [vmem:[%s32 + $0x28] sm:$0xff]
    %v40 = vld [vmem:[%s32 + $0x30] sm:$0xff]
    %v41 = vld [vmem:[%s32 + $0x38] sm:$0xff]
    %v42 = vld [vmem:[%s1] sm:$0xff]
    %v43 = vld [vmem:[%s1 + $0x8] sm:$0xff]
    %vm44 = vcmp.gt.s32.totalorder %v42, 0
    %v45 = vsel %vm44, %v42, 0
    %vm46 = vcmp.gt.s32.totalorder %v43, 0
    %v47 = vsel %vm46, %v43, 0
    %vm48 = vcmp.lt.s32.totalorder %v45, 63
    %v49 = vsel %vm48, %v45, 63
    %vm50 = vcmp.lt.s32.totalorder %v47, 63
    %v51 = vsel %vm50, %v47, 63
    %v52 = vlaneseq
    %v53 = vand.u32 %v52, 127
    %54 = vset.pattern.permute.xlu0 0
    %55 = vperm.xlu0 %54, %v49
    %v56 = vpop.permute.xlu0 %55
    %57 = vset.pattern.permute.xlu0 0
    %58 = vperm.xlu0 %57, %v51
    %v59 = vpop.permute.xlu0 %58
    %vm60 = vcmp.eq.s32.totalorder %v56, %v53
    %vm61 = vcmp.eq.s32.totalorder %v59, %v53
    %v62 = vsel %vm60, 1, 0
    %v63 = vsel %vm61, 1, 0
    %v64 = vcvt.s32.f32 %v62
    %v65 = vcvt.s32.f32 %v63
    %vm66 = vcmask 523264
    %v68 = vsel %vm66, %v64, 0
    %v71 = vsel %vm66, %v65, 0
    %73 = vmatpush.msra.mxu0 0.0
    %74 = vmatpush.msra.mxu0 0.0
    %75 = vmatpush.msra.mxu0 0.0
    %76 = vmatpush.msra.mxu0 0.0
    %77 = vmatpush.msra.mxu0 0.0
    %78 = vmatpush.msra.mxu0 0.0
    %79 = vmatpush.msra.mxu0 0.0
    %80 = vmatpush.msra.mxu0 0.0
    %81 = vmatpush.msra.mxu0 %v41
    %82 = vmatpush.msra.mxu0 %v40
    %83 = vmatpush.msra.mxu0 %v39
    %84 = vmatpush.msra.mxu0 %v38
    %85 = vmatpush.msra.mxu0 %v37
    %86 = vmatpush.msra.mxu0 %v36
    %87 = vmatpush.msra.mxu0 %v35
    %88 = vmatpush.msra.mxu0 %v34
    %89 = vmatmul.f32.gmra.mxu0 %v68
    %v90 = vpop.f32.mrf.mxu0
    %v91 = vadd.f32 0.0, %v90
    %92 = vmatmul.f32.gmra.mxu0 %v71
    %v93 = vpop.f32.mrf.mxu0
    %v94 = vadd.f32 0.0, %v93
    %95 = vdwg.mxu0
    %vm96 = vcmask 261120
    %97 = vst.msk [vmem:[#allocation4] sm:$0xff] %vm96, %v91
    %98 = vst.msk [vmem:[#allocation4 + $0x8] sm:$0xff] %vm96, %v94
    // Predicated region
    $region10: #{tpu_custom_call.1} parent=1 // pred_check
      _
    $region11: #{tpu_custom_call.1} parent=1 // pred_check_branch
      %100 = sbr.rel (0) target = $region13
    $region12: #{tpu_custom_call.1} parent=1 // pred_region
      %102 = vsyncadd [#allocation5], 0
      %s103 = sshll.u32 [#allocation4], 4
      %s104 = int_to_ptr.vmem [resolvable:$true] %s103
      %s105 = sshll.u32 %s3, 4
      %s106 = int_to_ptr.hbm [resolvable:$true] %s105
      %111 = dma.vmem_to_hbm [thread:$0]  %s104, 256, %s106, [#allocation5], 128, 128, 8
    $region13: #{tpu_custom_call.1} parent=1 // pred_fallthru
      _
    // Predicated region
    $region14: #{tpu_custom_call.1} parent=1 // pred_check
      _
    $region15: #{tpu_custom_call.1} parent=1 // pred_check_branch
      %113 = sbr.rel (0) target = $region17
    $region16: #{tpu_custom_call.1} parent=1 // pred_region
      %115 = dma.done [#allocation5], 256
    $region17: #{tpu_custom_call.1} parent=1 // pred_fallthru
      _
    %116 = vsyncpa [#allocation5], 1

</llo_original>
